<compile_context>
chip_gen: v7x
topology: tpu7x:2x2x1
jax: 0.10.0
libtpu: 0.0.40
codegen_flags: <defaults>
</compile_context>

<pallas_src>
import jax
import jax.numpy as jnp
from jax.experimental import pallas as pl
from jax.experimental.pallas import tpu as pltpu


def _sqrt1pm1_kernel(x_ref, o_ref):
    # sqrt(x^2 + 1) - 1 == x^2 / (sqrt(x^2 + 1) + 1)   (stable near x == 0)
    x = x_ref[...].astype(jnp.float32)
    x2 = x * x
    denom = jnp.sqrt(x2 + 1.0) + 1.0
    if o_ref.dtype == jnp.bfloat16 or o_ref.dtype == jnp.float16:
        # Low-precision outputs: approx reciprocal uses the otherwise-idle
        # EUP slot (keeps VALU free if more elementwise work is fused later).
        y = x2 * pl.reciprocal(denom, approx=True)
    else:
        y = x2 / denom  # exact divide: keeps f32 outputs within 1e-6 tolerance
    o_ref[...] = y.astype(o_ref.dtype)


def _round_up(n, m):
    return ((n + m - 1) // m) * m


@jax.jit
def function_layer(x):
    """Pallas TPU implementation of sqrt(x^2 + 1) - 1 for any input shape."""
    orig_shape = x.shape
    orig_dtype = x.dtype
    total = x.size

    if total == 0:
        return x

    # Widest lane-dense last dim that divides the element count -> zero-copy
    # reshape, unmasked stores, and no host-side pad/slice HBM round trips.
    lanes = None
    for cand in (1024, 512, 256, 128):
        if total % cand == 0:
            lanes = cand
            break

    pad = 0
    x_flat = x.reshape(-1)
    if lanes is None:
        lanes = 128
        pad = (-total) % 128  # <= 127 padded elements (rare path)
        x_flat = jnp.pad(x_flat, (0, pad))

    rows = (total + pad) // lanes
    x2d = x_flat.reshape(rows, lanes)

    # ~4 MiB (f32) per buffer: 1M elements per block.  With double-buffered
    # input + output that is ~16 MiB live, well under the v7x 64 MiB VMEM.
    TARGET_ELEMS_PER_BLOCK = 1 << 20
    max_tile_rows = max(8, _round_up(TARGET_ELEMS_PER_BLOCK // lanes, 8))

    if rows <= max_tile_rows:
        if rows >= 16:
            # Split into >= 2 row-blocks so both v7x TensorCores get work.
            tile_rows = _round_up(pl.cdiv(rows, 2), 8)
        else:
            # Tiny input: one whole-array block (full-dim block is always
            # layout-legal even when rows is not a multiple of 8).
            tile_rows = rows
    else:
        tile_rows = max_tile_rows
    grid = (pl.cdiv(rows, tile_rows),)

    out2d = pl.pallas_call(
        _sqrt1pm1_kernel,
        out_shape=jax.ShapeDtypeStruct((rows, lanes), orig_dtype),
        grid_spec=pltpu.PrefetchScalarGridSpec(
            num_scalar_prefetch=0,
            grid=grid,
            in_specs=[pl.BlockSpec((tile_rows, lanes), lambda i: (i, 0))],
            out_specs=pl.BlockSpec((tile_rows, lanes), lambda i: (i, 0)),
        ),
        compiler_params=pltpu.CompilerParams(
            dimension_semantics=("parallel",),
            vmem_limit_bytes=48 * 1024 * 1024,  # generation-aware: < v7x 64 MiB
        ),
    )(x2d)

    out_flat = out2d.reshape(-1)
    if pad:
        out_flat = out_flat[:total]
    return out_flat.reshape(orig_shape)


if __name__ == "__main__":
    key = jax.random.PRNGKey(0)

    # Small NCHW input consistent with a conv-style module: (B=2, C=4, H=16, W=16)
    x = jax.random.normal(key, (2, 4, 16, 16), dtype=jnp.float32)
    out = jax.block_until_ready(function_layer(x))
    ref = jnp.sqrt(x * x + 1.0) - 1.0
    assert out.shape == x.shape
    assert jnp.allclose(out, ref, atol=1e-6, rtol=1e-5)

    # Extra sanity check: unaligned element count exercises the pad path and
    # the multi-step parallel grid.
    key2 = jax.random.PRNGKey(0)
    x2 = jax.random.normal(key2, (2, 3, 17, 19), dtype=jnp.float32)
    out2 = jax.block_until_ready(function_layer(x2))
    ref2 = jnp.sqrt(x2 * x2 + 1.0) - 1.0
    assert out2.shape == x2.shape
    assert jnp.allclose(out2, ref2, atol=1e-6, rtol=1e-5)

    print("KERNEL_OK")
</pallas_src>

<mosaic_0001>
module attributes {stable_mosaic.version = 11 : i64} {
  func.func @_sqrt1pm1_kernel(%arg0: i32, %arg1: memref<2x1024xf32, #tpu.memory_space<vmem>>, %arg2: memref<2x1024xf32, #tpu.memory_space<vmem>>) attributes {dimension_semantics = [#tpu.dimension_semantics<parallel>], iteration_bounds = array<i64: 1>, scalar_prefetch = 0 : i64, scratch_operands = 0 : i64, tpu.core_type = #tpu.core_type<tc>, window_params = [{transform_indices = @transform_0, window_bounds = array<i64: 2, 1024>}, {transform_indices = @transform_1, window_bounds = array<i64: 2, 1024>}]} {
    %c0 = arith.constant 0 : index
    %c0_0 = arith.constant 0 : index
    %0 = vector.load %arg1[%c0, %c0_0] : memref<2x1024xf32, #tpu.memory_space<vmem>>, vector<2x1024xf32>
    %1 = arith.mulf %0, %0 : vector<2x1024xf32>
    %cst = arith.constant 1.000000e+00 : f32
    %2 = vector.broadcast %cst : f32 to vector<2x1024xf32>
    %3 = arith.addf %1, %2 : vector<2x1024xf32>
    %4 = math.sqrt %3 : vector<2x1024xf32>
    %cst_1 = arith.constant 1.000000e+00 : f32
    %5 = vector.broadcast %cst_1 : f32 to vector<2x1024xf32>
    %6 = arith.addf %4, %5 : vector<2x1024xf32>
    %7 = arith.divf %1, %6 : vector<2x1024xf32>
    %c0_2 = arith.constant 0 : index
    %c0_3 = arith.constant 0 : index
    %8 = vector.load %arg2[%c0_2, %c0_3] : memref<2x1024xf32, #tpu.memory_space<vmem>>, vector<2x1024xf32>
    tpu.vector_store %arg2[%c0_2, %c0_3], %7 {strides = array<i32>} : memref<2x1024xf32, #tpu.memory_space<vmem>>, vector<2x1024xf32>,
    return
  }
  func.func @transform_0(%arg0: i32) -> (i32, i32) {
    %c0_i32 = arith.constant 0 : i32
    %c0_i32_0 = arith.constant 0 : i32
    return %arg0, %c0_i32 : i32, i32
  }
  func.func @transform_1(%arg0: i32) -> (i32, i32) {
    %c0_i32 = arith.constant 0 : i32
    %c0_i32_0 = arith.constant 0 : i32
    return %arg0, %c0_i32 : i32, i32
  }
}

</mosaic_0001>

<llo_original>
// kernel: function_layer.1
$region0: #{function_layer.1}
  #allocation0 [shape = 'u32[]', space=smem, size = 0x4, offset = 0x4, fixed_abs, tag = 'smem constant byte address 0x4 - core index']
  #allocation1 [shape = 'u32[144,128]{1,0:T(1,128)}', space=vmem, size = 0x12000, scoped, tag = 'internal scratch']
  %s0 = inlined_call_operand.vmem [shape: f32[2,1024], index: 0, kind: input, shape index: {}]
  %s1 = inlined_call_operand.vmem [shape: f32[2,1024], index: 1, kind: output, shape index: {}]
  %s2 = sld [smem:[#allocation0]]
  $region14: #{function_layer.1} parent=0
    _
  %s4 = ssub.s32 1, %s2
  %s5 = scalar_select 0, %s4, %s2
  // Predicated region
  $region2: #{function_layer.1} parent=0 // pred_check
    _
  $region3: #{function_layer.1} parent=0 // pred_check_branch
    %7 = sbr.rel (0) target = $region5
  $region4: #{function_layer.1} parent=0 // pred_region
    _
  $region5: #{function_layer.1} parent=0 // pred_fallthru
    _
  %v8 = vld [vmem:[%s0] sm:$0xff]
  %v9 = vld [vmem:[%s0 + $0x8] sm:$0xff]
  %v10 = vmul.f32 %v8, %v8
  %v11 = vmul.f32 %v9, %v9
  %v12 = vadd.f32 %v10, 1.0
  %v13 = vadd.f32 %v11, 1.0
  %v14 = vrsqrt.pop %v12
  %v15 = vmul.f32 %v12, %v14
  %vm16 = vcmp.eq.f32.partialorder %v12, inf
  %v17 = vsel %vm16, %v12, %v15
  %vm18 = vcmp.eq.f32.partialorder %v12, 0.0
  %v19 = vand.u32 %v12, 2147483648
  %v20 = vsel %vm18, %v19, %v17
  %v21 = vrsqrt.pop %v13
  %v22 = vmul.f32 %v13, %v21
  %vm23 = vcmp.eq.f32.partialorder %v13, inf
  %v24 = vsel %vm23, %v13, %v22
  %vm25 = vcmp.eq.f32.partialorder %v13, 0.0
  %v26 = vand.u32 %v13, 2147483648
  %v27 = vsel %vm25, %v26, %v24
  %v28 = vadd.f32 %v20, 1.0
  %v29 = vadd.f32 %v27, 1.0
  %v30 = vrcp.pop %v28
  %v31 = vmul.f32 %v10, %v30
  %v32 = vrcp.pop %v29
  %v33 = vmul.f32 %v11, %v32
  %34 = vst [vmem:[%s1] sm:$0xff] %v31
  %35 = vst [vmem:[%s1 + $0x8] sm:$0xff] %v33
  // Predicated region
  $region6: #{function_layer.1} parent=0 // pred_check
    _
  $region7: #{function_layer.1} parent=0 // pred_check_branch
    %37 = sbr.rel (0) target = $region9
  $region8: #{function_layer.1} parent=0 // pred_region
    _
  $region9: #{function_layer.1} parent=0 // pred_fallthru
    _
  // Predicated region
  $region10: #{function_layer.1} parent=0 // pred_check
    _
  $region11: #{function_layer.1} parent=0 // pred_check_branch
    %39 = sbr.rel (0) target = $region13
  $region12: #{function_layer.1} parent=0 // pred_region
    _
  $region13: #{function_layer.1} parent=0 // pred_fallthru
    _

</llo_original>
